<compile_context>
chip_gen: v6e
topology: v6e:2x2x1
jax: 0.10.0
libtpu: 0.0.40
codegen_flags: <defaults>
</compile_context>

<pallas_src>
import jax
import jax.numpy as jnp
from jax import lax
from jax.experimental import pallas as pl
from jax.experimental.pallas import tpu as pltpu


def _round_up(n, m):
    return ((n + m - 1) // m) * m


def fixed_hidden_mlp_kernel(x_ref, wf_ref, bf_ref, w_ref, b_ref, out_ref):
    """One batch tile: two dependent MXU matmuls, then per-lane partial sums.

    out_ref block is (1, 2, 20):
      row 0 = sum over the tile's rows of y         (kept per output lane)
      row 1 = sum over the tile's rows of |y|       (kept per output lane)
    """
    x = x_ref[...]                                              # (TB, 20) f32

    # h1 = relu((x @ Wt + b) @ RW + 1) == relu(x @ Wf + bf)   (host-fused weights)
    h1 = jnp.maximum(
        jnp.dot(x, wf_ref[...], preferred_element_type=jnp.float32) + bf_ref[...],
        0.0)
    # y = h1 @ Wt + b    (the shared Linear applied again)
    y = jnp.dot(h1, w_ref[...], preferred_element_type=jnp.float32) + b_ref[...]

    # Sublane-only (batch-axis) reductions; the 20-lane cross-lane reduction is
    # deferred to the wrapper, keeping the per-tile path to the two dots + VPU.
    ps = jnp.sum(y, axis=0, keepdims=True)                      # (1, 20)
    pa = jnp.sum(jnp.abs(y), axis=0, keepdims=True)             # (1, 20)
    out_ref[0] = jnp.concatenate([ps, pa], axis=0)              # (2, 20)


def fixed_hidden_mlp(x, w_lin, b_lin, rand_weight, *, tb_max=4096):
    """x: (B, 20); w_lin: (out=20, in=20) PyTorch layout; b_lin: (20,); rand_weight: (20, 20)."""
    B, F = x.shape
    assert B >= 1 and F == 20 and w_lin.shape == (20, 20) and rand_weight.shape == (20, 20)

    x = x.astype(jnp.float32)
    w_t = jnp.transpose(w_lin).astype(jnp.float32)        # (in, out): kernel does x @ W_t + b
    b2d = b_lin.reshape(1, 20).astype(jnp.float32)
    rw = rand_weight.astype(jnp.float32)

    # Host-side fusion of the constant weights (first two matmuls -> one).
    wf = jnp.dot(w_t, rw)                                  # (20, 20)
    bf = jnp.dot(b2d, rw) + 1.0                            # (1, 20), "+1" folded in

    # Batch tiling: choose tile count first, then split evenly (TB multiple of 8).
    num_tiles = -(-B // int(tb_max))
    tb = _round_up(-(-B // num_tiles), 8)
    b_pad = num_tiles * tb
    if b_pad != B:
        x = jnp.pad(x, ((0, b_pad - B), (0, 0)))

    grid_spec = pltpu.PrefetchScalarGridSpec(
        num_scalar_prefetch=0,
        grid=(num_tiles,),
        in_specs=[
            pl.BlockSpec((tb, 20), lambda i: (i, 0)),      # x: streamed over batch
            pl.BlockSpec((20, 20), lambda i: (0, 0)),      # W_fused: VMEM-resident
            pl.BlockSpec((1, 20), lambda i: (0, 0)),       # b_fused: VMEM-resident
            pl.BlockSpec((20, 20), lambda i: (0, 0)),      # W_t    : VMEM-resident
            pl.BlockSpec((1, 20), lambda i: (0, 0)),       # b      : VMEM-resident
        ],
        out_specs=pl.BlockSpec((1, 2, 20), lambda i: (i, 0, 0)),   # per-tile partials
    )

    cost = pl.CostEstimate(
        flops=2 * 2 * b_pad * 20 * 20,                     # two 20x20 matmuls per row
        transcendentals=0,
        bytes_accessed=(b_pad * 20 * 4 + 2 * 20 * 20 * 4 + 2 * 20 * 4
                        + num_tiles * 2 * 20 * 4),
    )

    parts = pl.pallas_call(
        fixed_hidden_mlp_kernel,
        out_shape=jax.ShapeDtypeStruct((num_tiles, 2, 20), jnp.float32),
        grid_spec=grid_spec,
        compiler_params=pltpu.CompilerParams(
            dimension_semantics=("parallel",),             # independent tiles -> both TCs on v7x
            vmem_limit_bytes=32 * 1024 * 1024,             # headroom for big tiles on v5e
        ),
        cost_estimate=cost,
    )(x, wf, bf, w_t, b2d)

    # Final cross-lane / cross-tile reductions (tiny) in the wrapper.
    s_total = jnp.sum(parts[:, 0, :])
    sa_total = jnp.sum(parts[:, 1, :])

    # Padded rows are all-zero, so each contributed the constant
    #   y_pad = relu(0 @ Wf + bf) @ W_t + b = relu(bf) @ W_t + b.
    # Subtract their closed-form contribution instead of masking inside the kernel.
    n_pad = b_pad - B
    if n_pad:
        y_pad = jnp.dot(jnp.maximum(bf, 0.0), w_t) + b2d
        s_total = s_total - jnp.float32(n_pad) * jnp.sum(y_pad)
        sa_total = sa_total - jnp.float32(n_pad) * jnp.sum(jnp.abs(y_pad))

    # while x.abs().sum() > 1: x /= 2 ; return x.sum()
    # Halving every element of x exactly halves both reductions, so the loop runs
    # on the two scalars (same non-termination hazard on inf/NaN as PyTorch).
    def cond(c):
        return c[0] > jnp.float32(1.0)

    def body(c):
        return (c[0] * jnp.float32(0.5), c[1] * jnp.float32(0.5))

    _, s_final = lax.while_loop(cond, body, (sa_total, s_total))
    return s_final


def _reference(x, w_lin, b_lin, rand_weight):
    """Pure-JAX replica of the PyTorch forward (unfused), for checking."""
    h = x @ w_lin.T + b_lin
    h = jnp.maximum(h @ rand_weight + 1.0, 0.0)
    h = h @ w_lin.T + b_lin
    s_abs = jnp.sum(jnp.abs(h))
    s = jnp.sum(h)
    _, s_final = lax.while_loop(lambda c: c[0] > jnp.float32(1.0),
                                lambda c: (c[0] * 0.5, c[1] * 0.5),
                                (s_abs, s))
    return s_final


if __name__ == "__main__":
    key = jax.random.PRNGKey(0)
    k_rw, k_w, k_b, k_x1, k_x2 = jax.random.split(key, 5)

    # rand_weight = torch.rand((20, 20)) -> uniform[0, 1), fixed (no grad)
    rand_weight = jax.random.uniform(k_rw, (20, 20), jnp.float32)

    # nn.Linear(20, 20): weight (out, in), bias (out,), uniform(-1/sqrt(20), 1/sqrt(20))
    bound = 1.0 / (20.0 ** 0.5)
    w_lin = jax.random.uniform(k_w, (20, 20), jnp.float32, -bound, bound)
    b_lin = jax.random.uniform(k_b, (20,), jnp.float32, -bound, bound)

    # Small example consistent with Linear(20, 20): batch=2, features=20.
    # Exercises the closed-form padded-row correction (2 -> 8 rows).
    x_small = jax.random.uniform(k_x1, (2, 20), jnp.float32)
    got_small = fixed_hidden_mlp(x_small, w_lin, b_lin, rand_weight)
    jax.block_until_ready(got_small)
    ref_small = _reference(x_small, w_lin, b_lin, rand_weight)

    # Larger batch exercising the multi-tile "parallel" grid at the default
    # (large) tile size -- no artificial tb_max cap (per the performance review).
    x_big = jax.random.uniform(k_x2, (6000, 20), jnp.float32)
    got_big = fixed_hidden_mlp(x_big, w_lin, b_lin, rand_weight)
    jax.block_until_ready(got_big)
    ref_big = _reference(x_big, w_lin, b_lin, rand_weight)

    assert jnp.allclose(got_small, ref_small, rtol=1e-3, atol=1e-4), (got_small, ref_small)
    assert jnp.allclose(got_big, ref_big, rtol=1e-3, atol=1e-4), (got_big, ref_big)
    print("KERNEL_OK")
</pallas_src>

<mosaic_0001>
module attributes {stable_mosaic.version = 11 : i64} {
  func.func @fixed_hidden_mlp_kernel(%arg0: i32, %arg1: memref<8x20xf32, #tpu.memory_space<vmem>>, %arg2: memref<20x20xf32, #tpu.memory_space<vmem>>, %arg3: memref<1x20xf32, #tpu.memory_space<vmem>>, %arg4: memref<20x20xf32, #tpu.memory_space<vmem>>, %arg5: memref<1x20xf32, #tpu.memory_space<vmem>>, %arg6: memref<1x2x20xf32, #tpu.memory_space<vmem>>) attributes {dimension_semantics = [#tpu.dimension_semantics<parallel>], iteration_bounds = array<i64: 1>, scalar_prefetch = 0 : i64, scratch_operands = 0 : i64, tpu.core_type = #tpu.core_type<tc>, window_params = [{transform_indices = @transform_0, window_bounds = array<i64: 8, 20>}, {pipeline_mode = #tpu.pipeline_mode<synchronous>, transform_indices = @transform_1, window_bounds = array<i64: 20, 20>}, {pipeline_mode = #tpu.pipeline_mode<synchronous>, transform_indices = @transform_2, window_bounds = array<i64: 1, 20>}, {pipeline_mode = #tpu.pipeline_mode<synchronous>, transform_indices = @transform_3, window_bounds = array<i64: 20, 20>}, {pipeline_mode = #tpu.pipeline_mode<synchronous>, transform_indices = @transform_4, window_bounds = array<i64: 1, 20>}, {transform_indices = @transform_5, window_bounds = array<i64: 1, 2, 20>}]} {
    %c0 = arith.constant 0 : index
    %c0_0 = arith.constant 0 : index
    %0 = vector.load %arg1[%c0, %c0_0] : memref<8x20xf32, #tpu.memory_space<vmem>>, vector<8x20xf32>
    %c0_1 = arith.constant 0 : index
    %c0_2 = arith.constant 0 : index
    %1 = vector.load %arg2[%c0_1, %c0_2] : memref<20x20xf32, #tpu.memory_space<vmem>>, vector<20x20xf32>
    %cst = arith.constant dense<0.000000e+00> : vector<8x20xf32>
    %2 = tpu.matmul %0, %1, %cst {dimension_numbers = #tpu.dot_dimension_numbers<[1], [0], [0], [1], [0, 0, 1, 1], [], []>} : vector<8x20xf32>, vector<20x20xf32>, vector<8x20xf32> -> vector<8x20xf32>
    %c0_3 = arith.constant 0 : index
    %c0_4 = arith.constant 0 : index
    %3 = vector.load %arg3[%c0_3, %c0_4] : memref<1x20xf32, #tpu.memory_space<vmem>>, vector<1x20xf32>
    %4 = vector.broadcast %3 : vector<1x20xf32> to vector<8x20xf32>
    %5 = arith.addf %2, %4 : vector<8x20xf32>
    %cst_5 = arith.constant 0.000000e+00 : f32
    %6 = vector.broadcast %cst_5 : f32 to vector<8x20xf32>
    %7 = arith.maximumf %5, %6 : vector<8x20xf32>
    %c0_6 = arith.constant 0 : index
    %c0_7 = arith.constant 0 : index
    %8 = vector.load %arg4[%c0_6, %c0_7] : memref<20x20xf32, #tpu.memory_space<vmem>>, vector<20x20xf32>
    %cst_8 = arith.constant dense<0.000000e+00> : vector<8x20xf32>
    %9 = tpu.matmul %7, %8, %cst_8 {dimension_numbers = #tpu.dot_dimension_numbers<[1], [0], [0], [1], [0, 0, 1, 1], [], []>} : vector<8x20xf32>, vector<20x20xf32>, vector<8x20xf32> -> vector<8x20xf32>
    %c0_9 = arith.constant 0 : index
    %c0_10 = arith.constant 0 : index
    %10 = vector.load %arg5[%c0_9, %c0_10] : memref<1x20xf32, #tpu.memory_space<vmem>>, vector<1x20xf32>
    %11 = vector.broadcast %10 : vector<1x20xf32> to vector<8x20xf32>
    %12 = arith.addf %9, %11 : vector<8x20xf32>
    %cst_11 = arith.constant dense<0.000000e+00> : vector<20xf32>
    %13 = vector.multi_reduction <add>, %12, %cst_11 [0] : vector<8x20xf32> to vector<20xf32>
    %14 = vector.shape_cast %13 : vector<20xf32> to vector<1x20xf32>
    %15 = math.absf %12 : vector<8x20xf32>
    %cst_12 = arith.constant dense<0.000000e+00> : vector<20xf32>
    %16 = vector.multi_reduction <add>, %15, %cst_12 [0] : vector<8x20xf32> to vector<20xf32>
    %17 = vector.shape_cast %16 : vector<20xf32> to vector<1x20xf32>
    %18 = tpu.concatenate %14, %17 in 0 : vector<1x20xf32>, vector<1x20xf32> -> vector<2x20xf32>
    %c0_13 = arith.constant 0 : index
    %c0_14 = arith.constant 0 : index
    %c0_15 = arith.constant 0 : index
    %19 = vector.load %arg6[%c0_13, %c0_14, %c0_15] : memref<1x2x20xf32, #tpu.memory_space<vmem>>, vector<1x2x20xf32>
    %20 = vector.shape_cast %19 : vector<1x2x20xf32> to vector<2x20xf32>
    %21 = vector.shape_cast %18 : vector<2x20xf32> to vector<1x2x20xf32>
    tpu.vector_store %arg6[%c0_13, %c0_14, %c0_15], %21 {strides = array<i32>} : memref<1x2x20xf32, #tpu.memory_space<vmem>>, vector<1x2x20xf32>,
    return
  }
  func.func @transform_0(%arg0: i32) -> (i32, i32) {
    %c0_i32 = arith.constant 0 : i32
    %c0_i32_0 = arith.constant 0 : i32
    return %arg0, %c0_i32 : i32, i32
  }
  func.func @transform_1(%arg0: i32) -> (i32, i32) {
    %c0_i32 = arith.constant 0 : i32
    %c0_i32_0 = arith.constant 0 : i32
    %c0_i32_1 = arith.constant 0 : i32
    return %c0_i32, %c0_i32_0 : i32, i32
  }
  func.func @transform_2(%arg0: i32) -> (i32, i32) {
    %c0_i32 = arith.constant 0 : i32
    %c0_i32_0 = arith.constant 0 : i32
    %c0_i32_1 = arith.constant 0 : i32
    return %c0_i32, %c0_i32_0 : i32, i32
  }
  func.func @transform_3(%arg0: i32) -> (i32, i32) {
    %c0_i32 = arith.constant 0 : i32
    %c0_i32_0 = arith.constant 0 : i32
    %c0_i32_1 = arith.constant 0 : i32
    return %c0_i32, %c0_i32_0 : i32, i32
  }
  func.func @transform_4(%arg0: i32) -> (i32, i32) {
    %c0_i32 = arith.constant 0 : i32
    %c0_i32_0 = arith.constant 0 : i32
    %c0_i32_1 = arith.constant 0 : i32
    return %c0_i32, %c0_i32_0 : i32, i32
  }
  func.func @transform_5(%arg0: i32) -> (i32, i32, i32) {
    %c0_i32 = arith.constant 0 : i32
    %c0_i32_0 = arith.constant 0 : i32
    %c0_i32_1 = arith.constant 0 : i32
    return %arg0, %c0_i32, %c0_i32_0 : i32, i32, i32
  }
}

</mosaic_0001>

<llo_original>
// kernel: tpu_custom_call.1
$region0: #{tpu_custom_call.1}
  #allocation0 [shape = 'u32[]', space=smem, size = 0x4, offset = 0x4, fixed_abs, tag = 'smem constant byte address 0x4 - core index']
  #allocation1 [shape = 'u32[144,128]{1,0:T(1,128)}', space=vmem, size = 0x12000, scoped, tag = 'internal scratch']
  %s0 = inlined_call_operand.hbm [shape: f32[8,20], index: 0, kind: input, shape index: {}]
  %s1 = inlined_call_operand.hbm [shape: f32[20,20], index: 1, kind: input, shape index: {}]
  %s2 = inlined_call_operand.vmem [shape: f32[1,20], index: 2, kind: input, shape index: {}]
  %s3 = inlined_call_operand.hbm [shape: f32[20,20], index: 3, kind: input, shape index: {}]
  %s4 = inlined_call_operand.vmem [shape: f32[1,20], index: 4, kind: input, shape index: {}]
  %s5 = inlined_call_operand.hbm [shape: f32[1,2,20], index: 5, kind: output, shape index: {}]
  %s6 = sld [smem:[#allocation0]]
  $region42: #{tpu_custom_call.1} parent=0
    _
  %s8 = ssub.s32 1, %s6
  %s9 = scalar_select 0, %s8, %s6
  $region1: #{tpu_custom_call.1} parent=0
    #allocation2 [shape = 'u8[4096]{0}', space=vmem, size = 0x1000, scoped, tag = 'input window, operand 0, single buffered']
    #allocation3 [shape = 's32[1]{0}', space=sflag, size = 0x4, scoped, tag = 'scoped memory for tpu_custom_call.1']
    #allocation4 [shape = 's32[1]{0}', space=sflag, size = 0x4, scoped, tag = 'scoped memory for tpu_custom_call.1']
    #allocation5 [shape = 'u8[12288]{0}', space=vmem, size = 0x3000, scoped, tag = 'input window, operand 1, single buffered']
    #allocation6 [shape = 's32[1]{0}', space=sflag, size = 0x4, scoped, tag = 'scoped memory for tpu_custom_call.1']
    #allocation7 [shape = 'u8[12288]{0}', space=vmem, size = 0x3000, scoped, tag = 'input window, operand 3, single buffered']
    #allocation8 [shape = 'u8[1024]{0}', space=vmem, size = 0x400, scoped, tag = 'output window, operand 0, single buffered']
    %10 = vsyncpa [#allocation3], 0
    %11 = vsyncpa [#allocation6], 0
    %12 = vsyncpa [#allocation4], 0
    // Predicated region
    $region2: #{tpu_custom_call.1} parent=1 // pred_check
      _
    $region3: #{tpu_custom_call.1} parent=1 // pred_check_branch
      %14 = sbr.rel (0) target = $region5
    $region4: #{tpu_custom_call.1} parent=1 // pred_region
      %s16 = ssub.s32 128, 128
      %17 = vsyncadd [#allocation3], %s16
      %s19 = sshll.u32 [#allocation2], 4
      %s20 = int_to_ptr.vmem [resolvable:$true] %s19
      %22 = dma.hbm_to_vmem [thread:$0]  %s0, 128, %s20, [#allocation3]
    $region5: #{tpu_custom_call.1} parent=1 // pred_fallthru
      _
    // Predicated region
    $region6: #{tpu_custom_call.1} parent=1 // pred_check
      _
    $region7: #{tpu_custom_call.1} parent=1 // pred_check_branch
      %24 = sbr.rel (0) target = $region9
    $region8: #{tpu_custom_call.1} parent=1 // pred_region
      %s26 = ssub.s32 384, 384
      %27 = vsyncadd [#allocation6], %s26
      %s28 = sshll.u32 [#allocation5], 4
      %s29 = int_to_ptr.vmem [resolvable:$true] %s28
      %34 = dma.hbm_to_vmem [thread:$0]  %s1, 384, %s29, [#allocation6], 128, 128, 8
    $region9: #{tpu_custom_call.1} parent=1 // pred_fallthru
      _
    // Predicated region
    $region10: #{tpu_custom_call.1} parent=1 // pred_check
      _
    $region11: #{tpu_custom_call.1} parent=1 // pred_check_branch
      %36 = sbr.rel (0) target = $region13
    $region12: #{tpu_custom_call.1} parent=1 // pred_region
      _
    $region13: #{tpu_custom_call.1} parent=1 // pred_fallthru
      _
    // Predicated region
    $region14: #{tpu_custom_call.1} parent=1 // pred_check
      _
    $region15: #{tpu_custom_call.1} parent=1 // pred_check_branch
      %38 = sbr.rel (0) target = $region17
    $region16: #{tpu_custom_call.1} parent=1 // pred_region
      %s40 = ssub.s32 384, 384
      %41 = vsyncadd [#allocation6], %s40
      %s42 = sshll.u32 [#allocation7], 4
      %s43 = int_to_ptr.vmem [resolvable:$true] %s42
      %48 = dma.hbm_to_vmem [thread:$0]  %s3, 384, %s43, [#allocation6], 128, 128, 8
    $region17: #{tpu_custom_call.1} parent=1 // pred_fallthru
      _
    // Predicated region
    $region18: #{tpu_custom_call.1} parent=1 // pred_check
      _
    $region19: #{tpu_custom_call.1} parent=1 // pred_check_branch
      %50 = sbr.rel (0) target = $region21
    $region20: #{tpu_custom_call.1} parent=1 // pred_region
      _
    $region21: #{tpu_custom_call.1} parent=1 // pred_fallthru
      _
    // Predicated region
    $region22: #{tpu_custom_call.1} parent=1 // pred_check
      _
    $region23: #{tpu_custom_call.1} parent=1 // pred_check_branch
      %52 = sbr.rel (0) target = $region25
    $region24: #{tpu_custom_call.1} parent=1 // pred_region
      %53 = dma.done [#allocation3], 128
    $region25: #{tpu_custom_call.1} parent=1 // pred_fallthru
      _
    // Predicated region
    $region26: #{tpu_custom_call.1} parent=1 // pred_check
      _
    $region27: #{tpu_custom_call.1} parent=1 // pred_check_branch
      %55 = sbr.rel (0) target = $region29
    $region28: #{tpu_custom_call.1} parent=1 // pred_region
      %56 = dma.done [#allocation6], 384
    $region29: #{tpu_custom_call.1} parent=1 // pred_fallthru
      _
    // Predicated region
    $region30: #{tpu_custom_call.1} parent=1 // pred_check
      _
    $region31: #{tpu_custom_call.1} parent=1 // pred_check_branch
      %58 = sbr.rel (0) target = $region33
    $region32: #{tpu_custom_call.1} parent=1 // pred_region
      %59 = dma.done [#allocation6], 384
    $region33: #{tpu_custom_call.1} parent=1 // pred_fallthru
      _
    %v60 = vld [vmem:[#allocation2] sm:$0xff]
    %v61 = vld [vmem:[#allocation5] sm:$0xff]
    %v62 = vld [vmem:[#allocation5 + $0x8] sm:$0xff]
    %v63 = vld [vmem:[#allocation5 + $0x10] sm:$0xf]
    %v64 = vld [vmem:[%s2] sm:$0x1]
    %v66 = vlaneseq
    %v67 = vshrl.u32 %v66, 7
    %v68 = vsub.s32 0, %v67
    %v69 = vrot.slane %v64, %v68
    %vm71 = vcmask 162816
    %v73 = vsel %vm71, %v60, 0
    %vm75 = vcmask 1043456
    %v77 = vsel %vm75, %v63, 0
    %79 = vmatprep.subr.mxu0 0.0
    %80 = vmatpush1.msra.mxu0 0.0
    %81 = vmatprep.subr.mxu0 0.0
    %82 = vmatpush1.msra.mxu0 0.0
    %83 = vmatprep.subr.mxu0 0.0
    %84 = vmatpush1.msra.mxu0 0.0
    %85 = vmatprep.subr.mxu0 0.0
    %86 = vmatpush1.msra.mxu0 0.0
    %87 = vmatprep.subr.mxu0 0.0
    %88 = vmatpush1.msra.mxu0 0.0
    %89 = vmatprep.subr.mxu0 0.0
    %90 = vmatpush1.msra.mxu0 0.0
    %91 = vmatprep.subr.mxu0 0.0
    %92 = vmatpush1.msra.mxu0 0.0
    %93 = vmatprep.subr.mxu0 0.0
    %94 = vmatpush1.msra.mxu0 0.0
    %95 = vmatprep.subr.mxu0 0.0
    %96 = vmatpush1.msra.mxu0 0.0
    %97 = vmatprep.subr.mxu0 0.0
    %98 = vmatpush1.msra.mxu0 0.0
    %99 = vmatprep.subr.mxu0 0.0
    %100 = vmatpush1.msra.mxu0 0.0
    %101 = vmatprep.subr.mxu0 0.0
    %102 = vmatpush1.msra.mxu0 0.0
    %103 = vmatprep.subr.mxu0 0.0
    %104 = vmatpush1.msra.mxu0 0.0
    %105 = vmatprep.subr.mxu0 0.0
    %106 = vmatpush1.msra.mxu0 %v77
    %107 = vmatprep.subr.mxu0 0.0
    %108 = vmatpush1.msra.mxu0 %v62
    %109 = vmatprep.subr.mxu0 0.0
    %110 = vmatpush1.msra.mxu0 %v61
    %111 = vmatprep.subr.mxu0 0.0
    %112 = vmatpush2.msra.mxu0 0.0
    %113 = vmatprep.subr.mxu0 0.0
    %114 = vmatpush2.msra.mxu0 0.0
    %115 = vmatprep.subr.mxu0 0.0
    %116 = vmatpush2.msra.mxu0 0.0
    %117 = vmatprep.subr.mxu0 0.0
    %118 = vmatpush2.msra.mxu0 0.0
    %119 = vmatprep.subr.mxu0 0.0
    %120 = vmatpush2.msra.mxu0 0.0
    %121 = vmatprep.subr.mxu0 0.0
    %122 = vmatpush2.msra.mxu0 0.0
    %123 = vmatprep.subr.mxu0 0.0
    %124 = vmatpush2.msra.mxu0 0.0
    %125 = vmatprep.subr.mxu0 0.0
    %126 = vmatpush2.msra.mxu0 0.0
    %127 = vmatprep.subr.mxu0 0.0
    %128 = vmatpush2.msra.mxu0 0.0
    %129 = vmatprep.subr.mxu0 0.0
    %130 = vmatpush2.msra.mxu0 0.0
    %131 = vmatprep.subr.mxu0 0.0
    %132 = vmatpush2.msra.mxu0 0.0
    %133 = vmatprep.subr.mxu0 0.0
    %134 = vmatpush2.msra.mxu0 0.0
    %135 = vmatprep.subr.mxu0 0.0
    %136 = vmatpush2.msra.mxu0 0.0
    %137 = vmatprep.subr.mxu0 0.0
    %138 = vmatpush2.msra.mxu0 0.0
    %139 = vmatprep.subr.mxu0 0.0
    %140 = vmatpush2.msra.mxu0 0.0
    %141 = vmatprep.subr.mxu0 0.0
    %142 = vmatpush2.msra.mxu0 0.0
    %143 = vmatprep.mubr.f32.mxu0 0.0
    %144 = vmatmul.mubr.f32.gmra.mxu0 %v73
    %v145 = vpop.f32.mrf.mxu0
    %v146 = vadd.f32 %v69, %v145
    %v147 = vpop.f32.mrf.mxu0
    %148 = vdwg.mxu0
    %v149 = vmax.f32 %v146, 0.0
    %v150 = vld [vmem:[#allocation7] sm:$0xff]
    %v151 = vld [vmem:[#allocation7 + $0x8] sm:$0xff]
    %v152 = vld [vmem:[#allocation7 + $0x10] sm:$0xf]
    %v153 = vld [vmem:[%s4] sm:$0x1]
    %v155 = vlaneseq
    %v156 = vshrl.u32 %v155, 7
    %v157 = vsub.s32 0, %v156
    %v158 = vrot.slane %v153, %v157
    %v161 = vsel %vm71, %v149, 0
    %v164 = vsel %vm75, %v152, 0
    %166 = vmatprep.subr.mxu0 0.0
    %167 = vmatpush1.msra.mxu0 0.0
    %168 = vmatprep.subr.mxu0 0.0
    %169 = vmatpush1.msra.mxu0 0.0
    %170 = vmatprep.subr.mxu0 0.0
    %171 = vmatpush1.msra.mxu0 0.0
    %172 = vmatprep.subr.mxu0 0.0
    %173 = vmatpush1.msra.mxu0 0.0
    %174 = vmatprep.subr.mxu0 0.0
    %175 = vmatpush1.msra.mxu0 0.0
    %176 = vmatprep.subr.mxu0 0.0
    %177 = vmatpush1.msra.mxu0 0.0
    %178 = vmatprep.subr.mxu0 0.0
    %179 = vmatpush1.msra.mxu0 0.0
    %180 = vmatprep.subr.mxu0 0.0
    %181 = vmatpush1.msra.mxu0 0.0
    %182 = vmatprep.subr.mxu0 0.0
    %183 = vmatpush1.msra.mxu0 0.0
    %184 = vmatprep.subr.mxu0 0.0
    %185 = vmatpush1.msra.mxu0 0.0
    %186 = vmatprep.subr.mxu0 0.0
    %187 = vmatpush1.msra.mxu0 0.0
    %188 = vmatprep.subr.mxu0 0.0
    %189 = vmatpush1.msra.mxu0 0.0
    %190 = vmatprep.subr.mxu0 0.0
    %191 = vmatpush1.msra.mxu0 0.0
    %192 = vmatprep.subr.mxu0 0.0
    %193 = vmatpush1.msra.mxu0 %v164
    %194 = vmatprep.subr.mxu0 0.0
    %195 = vmatpush1.msra.mxu0 %v151
    %196 = vmatprep.subr.mxu0 0.0
    %197 = vmatpush1.msra.mxu0 %v150
    %198 = vmatprep.subr.mxu0 0.0
    %199 = vmatpush2.msra.mxu0 0.0
    %200 = vmatprep.subr.mxu0 0.0
    %201 = vmatpush2.msra.mxu0 0.0
    %202 = vmatprep.subr.mxu0 0.0
    %203 = vmatpush2.msra.mxu0 0.0
    %204 = vmatprep.subr.mxu0 0.0
    %205 = vmatpush2.msra.mxu0 0.0
    %206 = vmatprep.subr.mxu0 0.0
    %207 = vmatpush2.msra.mxu0 0.0
    %208 = vmatprep.subr.mxu0 0.0
    %209 = vmatpush2.msra.mxu0 0.0
    %210 = vmatprep.subr.mxu0 0.0
    %211 = vmatpush2.msra.mxu0 0.0
    %212 = vmatprep.subr.mxu0 0.0
    %213 = vmatpush2.msra.mxu0 0.0
    %214 = vmatprep.subr.mxu0 0.0
    %215 = vmatpush2.msra.mxu0 0.0
    %216 = vmatprep.subr.mxu0 0.0
    %217 = vmatpush2.msra.mxu0 0.0
    %218 = vmatprep.subr.mxu0 0.0
    %219 = vmatpush2.msra.mxu0 0.0
    %220 = vmatprep.subr.mxu0 0.0
    %221 = vmatpush2.msra.mxu0 0.0
    %222 = vmatprep.subr.mxu0 0.0
    %223 = vmatpush2.msra.mxu0 0.0
    %224 = vmatprep.subr.mxu0 0.0
    %225 = vmatpush2.msra.mxu0 0.0
    %226 = vmatprep.subr.mxu0 0.0
    %227 = vmatpush2.msra.mxu0 0.0
    %228 = vmatprep.subr.mxu0 0.0
    %229 = vmatpush2.msra.mxu0 0.0
    %230 = vmatprep.mubr.f32.mxu0 0.0
    %231 = vmatmul.mubr.f32.gmra.mxu0 %v161
    %v232 = vpop.f32.mrf.mxu0
    %v233 = vadd.f32 %v158, %v232
    %v234 = vpop.f32.mrf.mxu0
    %235 = vdwg.mxu0
    %v236 = vsel %vm71, %v233, 0.0
    %v237 = vrot.slane %v236, 4
    %v238 = vadd.f32 %v236, %v237
    %v239 = vrot.slane %v238, 2
    %v240 = vadd.f32 %v238, %v239
    %v241 = vrot.slane %v240, 1
    %v242 = vadd.f32 %v240, %v241
    %v243 = vand.u32 2147483647, %v233
    %v244 = vsel %vm71, %v243, 0.0
    %v245 = vrot.slane %v244, 4
    %v246 = vadd.f32 %v244, %v245
    %v247 = vrot.slane %v246, 2
    %v248 = vadd.f32 %v246, %v247
    %v249 = vrot.slane %v248, 1
    %v250 = vadd.f32 %v248, %v249
    %vm251 = vcmask 1040384
    %v252 = vsel %vm251, %v242, %v250
    %vm253 = vcmask 156672
    %254 = vst.msk [vmem:[#allocation8] sm:$0x3] %vm253, %v252
    // Predicated region
    $region34: #{tpu_custom_call.1} parent=1 // pred_check
      _
    $region35: #{tpu_custom_call.1} parent=1 // pred_check_branch
      %256 = sbr.rel (0) target = $region37
    $region36: #{tpu_custom_call.1} parent=1 // pred_region
      %s258 = ssub.s32 32, 32
      %259 = vsyncadd [#allocation4], %s258
      %s261 = sshll.u32 [#allocation8], 4
      %s262 = int_to_ptr.vmem [resolvable:$true] %s261
      %264 = dma.vmem_to_hbm [thread:$0]  %s262, 32, %s5, [#allocation4]
    $region37: #{tpu_custom_call.1} parent=1 // pred_fallthru
      _
    // Predicated region
    $region38: #{tpu_custom_call.1} parent=1 // pred_check
      _
    $region39: #{tpu_custom_call.1} parent=1 // pred_check_branch
      %266 = sbr.rel (0) target = $region41
    $region40: #{tpu_custom_call.1} parent=1 // pred_region
      %267 = dma.done [#allocation4], 32
    $region41: #{tpu_custom_call.1} parent=1 // pred_fallthru
      _
    %268 = vsyncpa [#allocation3], 1
    %269 = vsyncpa [#allocation6], 1
    %270 = vsyncpa [#allocation4], 1

</llo_original>
